<compile_context>
chip_gen: v7x
topology: tpu7x:2x2x1
jax: 0.10.0
libtpu: 0.0.40
codegen_flags: <defaults>
</compile_context>

<pallas_src>
import numpy as np
import jax
import jax.numpy as jnp
from jax.experimental import pallas as pl
from jax.experimental.pallas import tpu as pltpu

# ----------------------------- model hyperparameters -----------------------------
VOCAB_SIZE = 32
SEQ_LEN = 20
EMBED_DIM = 3
L = SEQ_LEN * EMBED_DIM                      # 60, flattened embedded length
CONV_CFG = [                                 # (kernel_size, stride, padding, keep)
    (21, 3, 21 // 2, 14),
    (24, 3, 24 // 2, 13),
    (27, 3, 27 // 2, 12),
    (30, 3, 30 // 2, 11),
]
FEAT = sum(c[3] for c in CONV_CFG)           # 50
OUT_DIM = 50
LANE_IN = 128                                # hidden lane width (conv features + bias rider)
LANE_OUT = 64                                # output lane width (>= OUT_DIM, halves writeback)
ONEHOT_W = SEQ_LEN * VOCAB_SIZE              # 640 (multiple of 128)


def _round_up(x, m):
    return ((x + m - 1) // m) * m


def _cdiv(a, b):
    return -(-a // b)


# ----------------------------- Pallas kernel -------------------------------------
def cnn_encoder_kernel(src_ref, expand_ref, vpat_ref, cw_ref, cb_ref, pw_ref, o_ref):
    # src_ref    : (TB, SEQ_LEN)   int32 token ids
    # expand_ref : (SEQ_LEN, 640)  bf16 replication matrix (id -> per-vocab lane)
    # vpat_ref   : (1, 640)        f32  lane pattern: lane s*V+v holds value v
    # cw_ref     : (640, 128)      bf16 embedding folded into the 4 conv Toeplitz mats
    # cb_ref     : (1, 128)        f32  conv biases (+1.0 rider in lane 127)
    # pw_ref     : (128, 64)       bf16 output projection (x @ W.T), bias in row 127
    # o_ref      : (TB, 64)        f32
    ids = src_ref[...].astype(jnp.bfloat16)                                   # exact (ids < 256)
    # gather-as-matmul: lane s*V+v of `rep` holds ids[b, s]  (single bf16 MXU pass)
    rep = jnp.dot(ids, expand_ref[...], preferred_element_type=jnp.float32)   # (TB, 640)
    onehot = (rep == vpat_ref[...]).astype(jnp.bfloat16)                      # exact 0/1
    # embedding gather + 4 convs in one MXU pass
    h = jnp.dot(onehot, cw_ref[...], preferred_element_type=jnp.float32)      # (TB, 128)
    h = jnp.maximum(h + cb_ref[...], 0.0)                                     # f32 VPU
    # output projection (proj bias rides along lane 127, which is exactly 1.0 after relu)
    o_ref[...] = jnp.dot(h.astype(jnp.bfloat16), pw_ref[...],
                         preferred_element_type=jnp.float32)                  # (TB, 64)


def _batch_tiling(B, block_b):
    """Balanced batch tiles: bounded padding waste, >=2 steps for dual-TC (v7x)."""
    steps = _cdiv(B, block_b)
    if steps == 1 and B > 16:
        steps = 2                      # keep both v7x TensorCores busy
    tb = _round_up(_cdiv(B, steps), 16)
    return tb, steps * tb


def cnn_encoder_pallas(src_ids, packed, *, block_b=1024):
    """src_ids: (B, SEQ_LEN) int32. Returns padded (Bp, LANE_OUT) f32."""
    B = src_ids.shape[0]
    TB, Bp = _batch_tiling(B, block_b)
    if Bp != B:
        src_ids = jnp.pad(src_ids, ((0, Bp - B), (0, 0)))   # id 0 is a valid token

    grid = (Bp // TB,)
    flops = 2 * Bp * (SEQ_LEN * ONEHOT_W + ONEHOT_W * LANE_IN + LANE_IN * LANE_OUT)
    weight_bytes = (SEQ_LEN * ONEHOT_W * 2 + ONEHOT_W * 4
                    + ONEHOT_W * LANE_IN * 2 + LANE_IN * 4 + LANE_IN * LANE_OUT * 2)
    bytes_accessed = Bp * (SEQ_LEN * 4 + LANE_OUT * 4) + weight_bytes

    return pl.pallas_call(
        cnn_encoder_kernel,
        out_shape=jax.ShapeDtypeStruct((Bp, LANE_OUT), jnp.float32),
        grid=grid,
        in_specs=[
            pl.BlockSpec((TB, SEQ_LEN), lambda i: (i, 0)),          # streamed ids
            pl.BlockSpec((SEQ_LEN, ONEHOT_W), lambda i: (0, 0)),    # VMEM-resident weights
            pl.BlockSpec((1, ONEHOT_W), lambda i: (0, 0)),
            pl.BlockSpec((ONEHOT_W, LANE_IN), lambda i: (0, 0)),
            pl.BlockSpec((1, LANE_IN), lambda i: (0, 0)),
            pl.BlockSpec((LANE_IN, LANE_OUT), lambda i: (0, 0)),
        ],
        out_specs=pl.BlockSpec((TB, LANE_OUT), lambda i: (i, 0)),
        compiler_params=pltpu.CompilerParams(
            dimension_semantics=("parallel",)),
        cost_estimate=pl.CostEstimate(flops=flops, transcendentals=0,
                                      bytes_accessed=bytes_accessed),
    )(src_ids, packed["expand"], packed["vpat"], packed["emb_conv"],
      packed["conv_bias"], packed["proj_w"])


def forward(packed, src):
    src = jnp.asarray(src, jnp.int32)
    was_1d = src.ndim == 1
    if was_1d:
        src = src[None, :]
    B = src.shape[0]
    out = cnn_encoder_pallas(src, packed)
    # NOTE: kept as a (cheap) 64->50 column / Bp->B row slice; a fused consumer would
    # absorb it.  The kernel itself only writes 64 f32 lanes per row.
    y = out[:B, :OUT_DIM]
    return y[0] if was_1d else y


# ----------------------------- parameter setup (host-side, done once) -------------
def conv_toeplitz(w, k, stride, pad, length, n_out):
    """Banded matrix M s.t. (x @ M)[:, t] == conv1d(x, w, stride, pad)[t]."""
    l_out = (length + 2 * pad - k) // stride + 1
    assert n_out <= l_out, "conv output shorter than requested slice"
    # TODO(synk): the F.pad branch of the PyTorch module (conv output shorter than the
    # keep-width) never triggers for seq_len=20 and is not modeled here.
    m = np.zeros((length, n_out), dtype=np.float32)
    for t in range(n_out):
        for j in range(k):
            src = t * stride + j - pad
            if 0 <= src < length:
                m[src, t] += float(w[j])
    return m


def init_params(key):
    ks = jax.random.split(key, 11)
    params = {}
    params["embedding"] = jax.random.normal(ks[0], (VOCAB_SIZE, EMBED_DIM), jnp.float32)
    conv_ws, conv_bs = [], []
    for i, (k, _, _, _) in enumerate(CONV_CFG):
        w = jax.random.normal(ks[1 + 2 * i], (k,), jnp.float32) * (1.0 / np.sqrt(k))
        b = jax.random.normal(ks[2 + 2 * i], (), jnp.float32) * 0.1
        conv_ws.append(w)
        conv_bs.append(b)
    params["conv_w"] = conv_ws
    params["conv_b"] = conv_bs
    params["proj_w"] = jax.random.normal(ks[9], (OUT_DIM, FEAT), jnp.float32) * (1.0 / np.sqrt(FEAT))
    params["proj_b"] = jax.random.normal(ks[10], (OUT_DIM,), jnp.float32) * 0.1
    return params


def pack_kernel_params(params):
    """Fold embedding + convs + biases into lane-padded kernel operands (run once)."""
    assert FEAT < LANE_IN - 1, "bias rider lane must stay zero in emb_conv"
    assert OUT_DIM <= LANE_OUT, "output must fit the 64-lane output tile"
    assert VOCAB_SIZE <= 256, "token ids must be exactly representable in bf16"

    mats, biases = [], []
    for (k, s, p, n), w, b in zip(CONV_CFG, params["conv_w"], params["conv_b"]):
        mats.append(conv_toeplitz(np.asarray(w), k, s, p, L, n))
        biases.append(np.full((n,), float(b), dtype=np.float32))
    conv_mat = np.concatenate(mats, axis=1)                         # (60, 50)
    conv_bias = np.concatenate(biases)                              # (50,)

    emb = np.asarray(params["embedding"], np.float32)               # (V, D)
    # M[s*V + v, j] = sum_d emb[v, d] * conv_mat[s*D + d, j]
    conv_mat_3 = conv_mat.reshape(SEQ_LEN, EMBED_DIM, FEAT)
    emb_conv = np.einsum("vd,sdj->svj", emb, conv_mat_3).reshape(ONEHOT_W, FEAT)
    emb_conv_pad = np.zeros((ONEHOT_W, LANE_IN), np.float32)
    emb_conv_pad[:, :FEAT] = emb_conv

    cb_pad = np.zeros((1, LANE_IN), np.float32)
    cb_pad[0, :FEAT] = conv_bias
    cb_pad[0, LANE_IN - 1] = 1.0                                    # rider lane -> 1 after relu

    pw = np.asarray(params["proj_w"], np.float32)                   # (50, 50)
    pb = np.asarray(params["proj_b"], np.float32)                   # (50,)
    pw_pad = np.zeros((LANE_IN, LANE_OUT), np.float32)
    pw_pad[:FEAT, :OUT_DIM] = pw.T                                  # x @ W.T
    pw_pad[LANE_IN - 1, :OUT_DIM] = pb                              # proj bias folded

    expand = np.zeros((SEQ_LEN, ONEHOT_W), np.float32)              # id replication (0/1)
    for s_ in range(SEQ_LEN):
        expand[s_, s_ * VOCAB_SIZE:(s_ + 1) * VOCAB_SIZE] = 1.0
    vpat = np.tile(np.arange(VOCAB_SIZE, dtype=np.float32), SEQ_LEN)[None, :]  # (1, 640)

    return {
        "expand": jnp.asarray(expand, jnp.bfloat16),                # bf16 (exact 0/1)
        "vpat": jnp.asarray(vpat),                                  # f32 (exact ints)
        "emb_conv": jnp.asarray(emb_conv_pad, jnp.bfloat16),        # bf16 MXU operand
        "conv_bias": jnp.asarray(cb_pad),                           # f32
        "proj_w": jnp.asarray(pw_pad, jnp.bfloat16),                # bf16 MXU operand
    }


# ----------------------------- references -----------------------------------------
def reference_packed(packed, src):
    """Plain-JAX mirror of the kernel's packed bf16 math (tight plumbing check)."""
    B = src.shape[0]
    onehot = jax.nn.one_hot(src, VOCAB_SIZE, dtype=jnp.bfloat16).reshape(B, ONEHOT_W)
    h = jnp.dot(onehot, packed["emb_conv"], preferred_element_type=jnp.float32)
    h = jnp.maximum(h + packed["conv_bias"], 0.0)
    y = jnp.dot(h.astype(jnp.bfloat16), packed["proj_w"],
                preferred_element_type=jnp.float32)
    return y[:, :OUT_DIM]


def reference_forward(params, src):
    """PyTorch-semantics f32 reference (structural check; bf16-weight tolerance)."""
    B = src.shape[0]
    hp = jax.lax.Precision.HIGHEST
    emb = jnp.take(params["embedding"], src, axis=0).reshape(B, L)
    outs = []
    for (k, s, p, n), w, b in zip(CONV_CFG, params["conv_w"], params["conv_b"]):
        xp = jnp.pad(emb, ((0, 0), (p, p)))
        l_out = (L + 2 * p - k) // s + 1
        y = jnp.stack([jnp.dot(xp[:, t * s:t * s + k], w, precision=hp)
                       for t in range(l_out)], axis=1) + b
        outs.append(jax.nn.relu(y)[:, :n])
    cat = jnp.concatenate(outs, axis=1)
    return jnp.dot(cat, params["proj_w"].T, precision=hp) + params["proj_b"]


# ----------------------------- main ------------------------------------------------
if __name__ == "__main__":
    key = jax.random.PRNGKey(0)
    pkey, dkey = jax.random.split(key)
    params = init_params(pkey)
    packed = pack_kernel_params(params)          # hoisted: host-side packing runs once

    B = 2
    src = jax.random.randint(dkey, (B, SEQ_LEN), 0, VOCAB_SIZE, dtype=jnp.int32)

    fwd = jax.jit(forward)
    out = jax.block_until_ready(fwd(packed, src))
    assert out.shape == (B, OUT_DIM), out.shape

    # Tight check: identical packed-bf16 math computed with plain JAX (incl. the bf16
    # cast of h before the projection, which is where v2's mismatch came from).
    ref_p = reference_packed(packed, src)
    np.testing.assert_allclose(np.asarray(out), np.asarray(ref_p), rtol=5e-3, atol=5e-3)

    # Structural check against the f32 PyTorch-semantics reference.  bf16 weight
    # quantization (emb_conv / proj_w / h) is intentional -> 5e-2 tolerance.
    ref_f = reference_forward(params, src)
    np.testing.assert_allclose(np.asarray(out), np.asarray(ref_f), rtol=5e-2, atol=5e-2)

    print("KERNEL_OK")
</pallas_src>

<mosaic_0001>
module attributes {stable_mosaic.version = 11 : i64} {
  func.func @cnn_encoder_kernel(%arg0: i32, %arg1: memref<16x20xi32, #tpu.memory_space<vmem>>, %arg2: memref<20x640xbf16, #tpu.memory_space<vmem>>, %arg3: memref<1x640xf32, #tpu.memory_space<vmem>>, %arg4: memref<640x128xbf16, #tpu.memory_space<vmem>>, %arg5: memref<1x128xf32, #tpu.memory_space<vmem>>, %arg6: memref<128x64xbf16, #tpu.memory_space<vmem>>, %arg7: memref<16x64xf32, #tpu.memory_space<vmem>>) attributes {dimension_semantics = [#tpu.dimension_semantics<parallel>], iteration_bounds = array<i64: 1>, scalar_prefetch = 0 : i64, scratch_operands = 0 : i64, tpu.core_type = #tpu.core_type<tc>, window_params = [{transform_indices = @transform_0, window_bounds = array<i64: 16, 20>}, {pipeline_mode = #tpu.pipeline_mode<synchronous>, transform_indices = @transform_1, window_bounds = array<i64: 20, 640>}, {pipeline_mode = #tpu.pipeline_mode<synchronous>, transform_indices = @transform_2, window_bounds = array<i64: 1, 640>}, {pipeline_mode = #tpu.pipeline_mode<synchronous>, transform_indices = @transform_3, window_bounds = array<i64: 640, 128>}, {pipeline_mode = #tpu.pipeline_mode<synchronous>, transform_indices = @transform_4, window_bounds = array<i64: 1, 128>}, {pipeline_mode = #tpu.pipeline_mode<synchronous>, transform_indices = @transform_5, window_bounds = array<i64: 128, 64>}, {transform_indices = @transform_6, window_bounds = array<i64: 16, 64>}]} {
    %c0 = arith.constant 0 : index
    %c0_0 = arith.constant 0 : index
    %0 = vector.load %arg1[%c0, %c0_0] : memref<16x20xi32, #tpu.memory_space<vmem>>, vector<16x20xi32>
    %1 = arith.sitofp %0 : vector<16x20xi32> to vector<16x20xbf16>
    %c0_1 = arith.constant 0 : index
    %c0_2 = arith.constant 0 : index
    %2 = vector.load %arg2[%c0_1, %c0_2] : memref<20x640xbf16, #tpu.memory_space<vmem>>, vector<20x640xbf16>
    %cst = arith.constant dense<0.000000e+00> : vector<16x640xf32>
    %3 = tpu.matmul %1, %2, %cst {dimension_numbers = #tpu.dot_dimension_numbers<[1], [0], [0], [1], [0, 0, 1, 1], [], []>} : vector<16x20xbf16>, vector<20x640xbf16>, vector<16x640xf32> -> vector<16x640xf32>
    %c0_3 = arith.constant 0 : index
    %c0_4 = arith.constant 0 : index
    %4 = vector.load %arg3[%c0_3, %c0_4] : memref<1x640xf32, #tpu.memory_space<vmem>>, vector<1x640xf32>
    %5 = vector.broadcast %4 : vector<1x640xf32> to vector<16x640xf32>
    %6 = arith.cmpf oeq, %3, %5 : vector<16x640xf32>
    %7 = arith.extui %6 : vector<16x640xi1> to vector<16x640xi32>
    %8 = arith.sitofp %7 : vector<16x640xi32> to vector<16x640xf32>
    %9 = arith.truncf %8 : vector<16x640xf32> to vector<16x640xbf16>
    %c0_5 = arith.constant 0 : index
    %c0_6 = arith.constant 0 : index
    %10 = vector.load %arg4[%c0_5, %c0_6] : memref<640x128xbf16, #tpu.memory_space<vmem>>, vector<640x128xbf16>
    %cst_7 = arith.constant dense<0.000000e+00> : vector<16x128xf32>
    %11 = tpu.matmul %9, %10, %cst_7 {dimension_numbers = #tpu.dot_dimension_numbers<[1], [0], [0], [1], [0, 0, 1, 1], [], []>} : vector<16x640xbf16>, vector<640x128xbf16>, vector<16x128xf32> -> vector<16x128xf32>
    %c0_8 = arith.constant 0 : index
    %c0_9 = arith.constant 0 : index
    %12 = vector.load %arg5[%c0_8, %c0_9] : memref<1x128xf32, #tpu.memory_space<vmem>>, vector<1x128xf32>
    %13 = vector.broadcast %12 : vector<1x128xf32> to vector<16x128xf32>
    %14 = arith.addf %11, %13 : vector<16x128xf32>
    %cst_10 = arith.constant 0.000000e+00 : f32
    %15 = vector.broadcast %cst_10 : f32 to vector<16x128xf32>
    %16 = arith.maximumf %14, %15 : vector<16x128xf32>
    %17 = arith.truncf %16 : vector<16x128xf32> to vector<16x128xbf16>
    %c0_11 = arith.constant 0 : index
    %c0_12 = arith.constant 0 : index
    %18 = vector.load %arg6[%c0_11, %c0_12] : memref<128x64xbf16, #tpu.memory_space<vmem>>, vector<128x64xbf16>
    %cst_13 = arith.constant dense<0.000000e+00> : vector<16x64xf32>
    %19 = tpu.matmul %17, %18, %cst_13 {dimension_numbers = #tpu.dot_dimension_numbers<[1], [0], [0], [1], [0, 0, 1, 1], [], []>} : vector<16x128xbf16>, vector<128x64xbf16>, vector<16x64xf32> -> vector<16x64xf32>
    %c0_14 = arith.constant 0 : index
    %c0_15 = arith.constant 0 : index
    %20 = vector.load %arg7[%c0_14, %c0_15] : memref<16x64xf32, #tpu.memory_space<vmem>>, vector<16x64xf32>
    tpu.vector_store %arg7[%c0_14, %c0_15], %19 {strides = array<i32>} : memref<16x64xf32, #tpu.memory_space<vmem>>, vector<16x64xf32>,
    return
  }
  func.func @transform_0(%arg0: i32) -> (i32, i32) {
    %c0_i32 = arith.constant 0 : i32
    %c0_i32_0 = arith.constant 0 : i32
    return %arg0, %c0_i32 : i32, i32
  }
  func.func @transform_1(%arg0: i32) -> (i32, i32) {
    %c0_i32 = arith.constant 0 : i32
    %c0_i32_0 = arith.constant 0 : i32
    %c0_i32_1 = arith.constant 0 : i32
    return %c0_i32, %c0_i32_0 : i32, i32
  }
  func.func @transform_2(%arg0: i32) -> (i32, i32) {
    %c0_i32 = arith.constant 0 : i32
    %c0_i32_0 = arith.constant 0 : i32
    %c0_i32_1 = arith.constant 0 : i32
    return %c0_i32, %c0_i32_0 : i32, i32
  }
  func.func @transform_3(%arg0: i32) -> (i32, i32) {
    %c0_i32 = arith.constant 0 : i32
    %c0_i32_0 = arith.constant 0 : i32
    %c0_i32_1 = arith.constant 0 : i32
    return %c0_i32, %c0_i32_0 : i32, i32
  }
  func.func @transform_4(%arg0: i32) -> (i32, i32) {
    %c0_i32 = arith.constant 0 : i32
    %c0_i32_0 = arith.constant 0 : i32
    %c0_i32_1 = arith.constant 0 : i32
    return %c0_i32, %c0_i32_0 : i32, i32
  }
  func.func @transform_5(%arg0: i32) -> (i32, i32) {
    %c0_i32 = arith.constant 0 : i32
    %c0_i32_0 = arith.constant 0 : i32
    %c0_i32_1 = arith.constant 0 : i32
    return %c0_i32, %c0_i32_0 : i32, i32
  }
  func.func @transform_6(%arg0: i32) -> (i32, i32) {
    %c0_i32 = arith.constant 0 : i32
    %c0_i32_0 = arith.constant 0 : i32
    return %arg0, %c0_i32 : i32, i32
  }
}

</mosaic_0001>

<llo_original>
// kernel: forward.1
$region0: #{forward.1}
  #allocation0 [shape = 'u32[]', space=smem, size = 0x4, offset = 0x4, fixed_abs, tag = 'smem constant byte address 0x4 - core index']
  #allocation1 [shape = 'u32[144,128]{1,0:T(1,128)}', space=vmem, size = 0x12000, scoped, tag = 'internal scratch']
  %s0 = inlined_call_operand.vmem [shape: s32[16,20], index: 0, kind: input, shape index: {}]
  %s1 = inlined_call_operand.vmem [shape: bf16[20,640], index: 1, kind: input, shape index: {}]
  %s2 = inlined_call_operand.vmem [shape: f32[1,640], index: 2, kind: input, shape index: {}]
  %s3 = inlined_call_operand.hbm [shape: bf16[640,128], index: 3, kind: input, shape index: {}]
  %s4 = inlined_call_operand.vmem [shape: f32[1,128], index: 4, kind: input, shape index: {}]
  %s5 = inlined_call_operand.vmem [shape: bf16[128,64], index: 5, kind: input, shape index: {}]
  %s6 = inlined_call_operand.vmem [shape: f32[16,64], index: 6, kind: output, shape index: {}]
  %s7 = sld [smem:[#allocation0]]
  $region38: #{forward.1} parent=0
    _
  %s9 = ssub.s32 1, %s7
  %s10 = scalar_select 0, %s9, %s7
  $region1: #{forward.1} parent=0
    #allocation2 [shape = 'u8[163840]{0}', space=vmem, size = 0x28000, scoped, tag = 'input window, operand 3, single buffered']
    #allocation3 [shape = 's32[1]{0}', space=sflag, size = 0x4, scoped, tag = 'scoped memory for forward.1']
    %11 = vsyncpa [#allocation3], 0
    // Predicated region
    $region2: #{forward.1} parent=1 // pred_check
      _
    $region3: #{forward.1} parent=1 // pred_check_branch
      %13 = sbr.rel (0) target = $region5
    $region4: #{forward.1} parent=1 // pred_region
      _
    $region5: #{forward.1} parent=1 // pred_fallthru
      _
    // Predicated region
    $region6: #{forward.1} parent=1 // pred_check
      _
    $region7: #{forward.1} parent=1 // pred_check_branch
      %15 = sbr.rel (0) target = $region9
    $region8: #{forward.1} parent=1 // pred_region
      _
    $region9: #{forward.1} parent=1 // pred_fallthru
      _
    // Predicated region
    $region10: #{forward.1} parent=1 // pred_check
      _
    $region11: #{forward.1} parent=1 // pred_check_branch
      %17 = sbr.rel (0) target = $region13
    $region12: #{forward.1} parent=1 // pred_region
      _
    $region13: #{forward.1} parent=1 // pred_fallthru
      _
    // Predicated region
    $region14: #{forward.1} parent=1 // pred_check
      _
    $region15: #{forward.1} parent=1 // pred_check_branch
      %19 = sbr.rel (0) target = $region17
    $region16: #{forward.1} parent=1 // pred_region
      %s21 = ssub.s32 5120, 5120
      %22 = vsyncadd [#allocation3], %s21
      %s23 = sshll.u32 [#allocation2], 4
      %s24 = int_to_ptr.vmem [resolvable:$true] %s23
      %29 = dma.hbm_to_vmem [thread:$0]  %s3, 5120, %s24, [#allocation3], 64, 64, 4
    $region17: #{forward.1} parent=1 // pred_fallthru
      _
    // Predicated region
    $region18: #{forward.1} parent=1 // pred_check
      _
    $region19: #{forward.1} parent=1 // pred_check_branch
      %31 = sbr.rel (0) target = $region21
    $region20: #{forward.1} parent=1 // pred_region
      _
    $region21: #{forward.1} parent=1 // pred_fallthru
      _
    // Predicated region
    $region22: #{forward.1} parent=1 // pred_check
      _
    $region23: #{forward.1} parent=1 // pred_check_branch
      %33 = sbr.rel (0) target = $region25
    $region24: #{forward.1} parent=1 // pred_region
      _
    $region25: #{forward.1} parent=1 // pred_fallthru
      _
    // Predicated region
    $region26: #{forward.1} parent=1 // pred_check
      _
    $region27: #{forward.1} parent=1 // pred_check_branch
      %35 = sbr.rel (0) target = $region29
    $region28: #{forward.1} parent=1 // pred_region
      %36 = dma.done [#allocation3], 5120
    $region29: #{forward.1} parent=1 // pred_fallthru
      _
    %v38 = vld [vmem:[%s0] sm:$0xff]
    %v39 = vld [vmem:[%s0 + $0x8] sm:$0xff]
    %v40 = vcvt.s32.f32 %v38
    %v41 = vcvt.s32.f32 %v39
    %v42 = vpack.c.bf16 %v41, %v40
    %v43 = vld [vmem:[%s1] sm:$0xff]
    %v44 = vld [vmem:[%s1 + $0x8] sm:$0xff]
    %v45 = vld [vmem:[%s1 + $0x10] sm:$0xf]
    %v46 = vld [vmem:[%s1 + $0x14] sm:$0xff]
    %v47 = vld [vmem:[%s1 + $0x1c] sm:$0xff]
    %v48 = vld [vmem:[%s1 + $0x24] sm:$0xf]
    %v49 = vld [vmem:[%s1 + $0x28] sm:$0x33]
    %v50 = vld [vmem:[%s1 + $0x30] sm:$0x33]
    %v51 = vld [vmem:[%s1 + $0x38] sm:$0x3]
    %v61 = vunpack.c.l.b16 %v43
    %v62 = vunpack.c.h.b16 %v43
    %v63 = vunpack.c.l.b16 %v44
    %v64 = vunpack.c.h.b16 %v44
    %v65 = vunpack.c.l.b16 %v45
    %v66 = vunpack.c.l.b16 %v46
    %v67 = vunpack.c.h.b16 %v46
    %v68 = vunpack.c.l.b16 %v47
    %v69 = vunpack.c.h.b16 %v47
    %v70 = vunpack.c.l.b16 %v48
    %v71 = vunpack.c.l.b16 %v49
    %v72 = vunpack.c.h.b16 %v49
    %v73 = vunpack.c.l.b16 %v50
    %v74 = vunpack.c.h.b16 %v50
    %v75 = vunpack.c.l.b16 %v51
    %v76 = vpack.c.b16 %v66, %v61
    %v77 = vpack.c.b16 %v67, %v62
    %v78 = vpack.c.b16 %v68, %v63
    %v79 = vpack.c.b16 %v69, %v64
    %v80 = vpack.c.b16 %v70, %v65
    %v81 = vpack.c.b16 %v71, %v71
    %v82 = vpack.c.b16 %v72, %v72
    %v83 = vpack.c.b16 %v73, %v73
    %v84 = vpack.c.b16 %v74, %v74
    %v85 = vpack.c.b16 %v75, %v75
    %vm91 = vcmask 162816
    %v93 = vsel %vm91, %v42, 0
    %vm95 = vcmask 1041408
    %v97 = vsel %vm95, %v81, 0
    %v100 = vsel %vm95, %v82, 0
    %v103 = vsel %vm95, %v83, 0
    %v106 = vsel %vm95, %v84, 0
    %v109 = vsel %vm95, %v85, 0
    %111 = vmatprep.subr.bf16.mxu0 %v77
    %112 = vmatpush1.bf16.msra.mxu0 %v76
    %113 = vmatprep.subr.bf16.mxu0 %v100
    %114 = vmatpush1.bf16.msra.mxu0 %v97
    %115 = vmatprep.subr.bf16.mxu0 0
    %116 = vmatpush1.bf16.msra.mxu0 0
    %117 = vmatprep.subr.bf16.mxu0 0
    %118 = vmatpush1.bf16.msra.mxu0 0
    %119 = vmatprep.subr.bf16.mxu0 0
    %120 = vmatpush1.bf16.msra.mxu0 0
    %121 = vmatprep.subr.bf16.mxu0 0
    %122 = vmatpush1.bf16.msra.mxu0 0
    %123 = vmatprep.subr.bf16.mxu0 0
    %124 = vmatpush1.bf16.msra.mxu0 0
    %125 = vmatprep.subr.bf16.mxu0 0
    %126 = vmatpush1.bf16.msra.mxu0 0
    %127 = vmatprep.subr.bf16.mxu0 0
    %128 = vmatpush1.bf16.msra.mxu0 0
    %129 = vmatprep.subr.bf16.mxu0 0
    %130 = vmatpush1.bf16.msra.mxu0 0
    %131 = vmatprep.subr.bf16.mxu0 0
    %132 = vmatpush1.bf16.msra.mxu0 0
    %133 = vmatprep.subr.bf16.mxu0 0
    %134 = vmatpush1.bf16.msra.mxu0 0
    %135 = vmatprep.subr.bf16.mxu0 0
    %136 = vmatpush1.bf16.msra.mxu0 0
    %137 = vmatprep.subr.bf16.mxu0 0
    %138 = vmatpush1.bf16.msra.mxu0 0
    %139 = vmatprep.subr.bf16.mxu0 0
    %140 = vmatpush1.bf16.msra.mxu0 0
    %141 = vmatprep.subr.bf16.mxu0 0
    %142 = vmatpush1.bf16.msra.mxu0 0
    %143 = vmatprep.mubr.bf16.mxu0 0
    %144 = vmatmul.mubr.bf16.gmra.mrb[0].mxu0 %v93
    %v145 = vpop.f32.mrb[0].mxu0
    %v146 = vadd.f32 0.0, %v145
    %v147 = vpop.f32.mrb[0].mxu0
    %v148 = vadd.f32 0.0, %v147
    %v149 = vpop.f32.mrb[0].mxu0
    %v150 = vadd.f32 0.0, %v149
    %v151 = vpop.f32.mrb[0].mxu0
    %v152 = vadd.f32 0.0, %v151
    %153 = vdwg.mxu0
    %154 = vmatprep.subr.bf16.mxu0 %v79
    %155 = vmatpush1.bf16.msra.mxu0 %v78
    %156 = vmatprep.subr.bf16.mxu0 %v106
    %157 = vmatpush1.bf16.msra.mxu0 %v103
    %158 = vmatprep.subr.bf16.mxu0 0
    %159 = vmatpush1.bf16.msra.mxu0 0
    %160 = vmatprep.subr.bf16.mxu0 0
    %161 = vmatpush1.bf16.msra.mxu0 0
    %162 = vmatprep.subr.bf16.mxu0 0
    %163 = vmatpush1.bf16.msra.mxu0 0
    %164 = vmatprep.subr.bf16.mxu0 0
    %165 = vmatpush1.bf16.msra.mxu0 0
    %166 = vmatprep.subr.bf16.mxu0 0
    %167 = vmatpush1.bf16.msra.mxu0 0
    %168 = vmatprep.subr.bf16.mxu0 0
    %169 = vmatpush1.bf16.msra.mxu0 0
    %170 = vmatprep.subr.bf16.mxu0 0
    %171 = vmatpush1.bf16.msra.mxu0 0
    %172 = vmatprep.subr.bf16.mxu0 0
    %173 = vmatpush1.bf16.msra.mxu0 0
    %174 = vmatprep.subr.bf16.mxu0 0
    %175 = vmatpush1.bf16.msra.mxu0 0
    %176 = vmatprep.subr.bf16.mxu0 0
    %177 = vmatpush1.bf16.msra.mxu0 0
    %178 = vmatprep.subr.bf16.mxu0 0
    %179 = vmatpush1.bf16.msra.mxu0 0
    %180 = vmatprep.subr.bf16.mxu0 0
    %181 = vmatpush1.bf16.msra.mxu0 0
    %182 = vmatprep.subr.bf16.mxu0 0
    %183 = vmatpush1.bf16.msra.mxu0 0
    %184 = vmatprep.subr.bf16.mxu0 0
    %185 = vmatpush1.bf16.msra.mxu0 0
    %186 = vmatprep.mubr.bf16.mxu0 0
    %187 = vmatmul.mubr.bf16.gmra.mrb[0].mxu0 %v93
    %v188 = vpop.f32.mrb[0].mxu0
    %v189 = vadd.f32 0.0, %v188
    %v190 = vpop.f32.mrb[0].mxu0
    %v191 = vadd.f32 0.0, %v190
    %v192 = vpop.f32.mrb[0].mxu0
    %v193 = vadd.f32 0.0, %v192
    %v194 = vpop.f32.mrb[0].mxu0
    %v195 = vadd.f32 0.0, %v194
    %196 = vdwg.mxu0
    %197 = vmatprep.subr.bf16.mxu0 0
    %198 = vmatpush1.bf16.msra.mxu0 %v80
    %199 = vmatprep.subr.bf16.mxu0 0
    %200 = vmatpush1.bf16.msra.mxu0 %v109
    %201 = vmatprep.subr.bf16.mxu0 0
    %202 = vmatpush1.bf16.msra.mxu0 0
    %203 = vmatprep.subr.bf16.mxu0 0
    %204 = vmatpush1.bf16.msra.mxu0 0
    %205 = vmatprep.subr.bf16.mxu0 0
    %206 = vmatpush1.bf16.msra.mxu0 0
    %207 = vmatprep.subr.bf16.mxu0 0
    %208 = vmatpush1.bf16.msra.mxu0 0
    %209 = vmatprep.subr.bf16.mxu0 0
    %210 = vmatpush1.bf16.msra.mxu0 0
    %211 = vmatprep.subr.bf16.mxu0 0
    %212 = vmatpush1.bf16.msra.mxu0 0
    %213 = vmatprep.subr.bf16.mxu0 0
    %214 = vmatpush1.bf16.msra.mxu0 0
    %215 = vmatprep.subr.bf16.mxu0 0
    %216 = vmatpush1.bf16.msra.mxu0 0
    %217 = vmatprep.subr.bf16.mxu0 0
    %218 = vmatpush1.bf16.msra.mxu0 0
    %219 = vmatprep.subr.bf16.mxu0 0
    %220 = vmatpush1.bf16.msra.mxu0 0
    %221 = vmatprep.subr.bf16.mxu0 0
    %222 = vmatpush1.bf16.msra.mxu0 0
    %223 = vmatprep.subr.bf16.mxu0 0
    %224 = vmatpush1.bf16.msra.mxu0 0
    %225 = vmatprep.subr.bf16.mxu0 0
    %226 = vmatpush1.bf16.msra.mxu0 0
    %227 = vmatprep.subr.bf16.mxu0 0
    %228 = vmatpush1.bf16.msra.mxu0 0
    %229 = vmatprep.mubr.bf16.mxu0 0
    %230 = vmatmul.mubr.bf16.gmra.mrb[0].mxu0 %v93
    %v231 = vpop.f32.mrb[0].mxu0
    %v232 = vadd.f32 0.0, %v231
    %v233 = vpop.f32.mrb[0].mxu0
    %v234 = vpop.f32.mrb[0].mxu0
    %v235 = vadd.f32 0.0, %v234
    %v236 = vpop.f32.mrb[0].mxu0
    %237 = vdwg.mxu0
    %v238 = vld [vmem:[%s2] sm:$0x1f]
    %v240 = vlaneseq
    %v241 = vshrl.u32 %v240, 7
    %v242 = vsub.s32 0, %v241
    %v243 = vrot.slane %v238, %v242
    %v244 = vlaneseq
    %v245 = vshrl.u32 %v244, 7
    %v246 = vsub.s32 1, %v245
    %v247 = vrot.slane %v238, %v246
    %v248 = vlaneseq
    %v249 = vshrl.u32 %v248, 7
    %v250 = vsub.s32 2, %v249
    %v251 = vrot.slane %v238, %v250
    %v252 = vlaneseq
    %v253 = vshrl.u32 %v252, 7
    %v254 = vsub.s32 3, %v253
    %v255 = vrot.slane %v238, %v254
    %v256 = vlaneseq
    %v257 = vshrl.u32 %v256, 7
    %v258 = vsub.s32 4, %v257
    %v259 = vrot.slane %v238, %v258
    %vm265 = vcmp.eq.f32.partialorder %v146, %v243
    %vm266 = vcmp.eq.f32.partialorder %v148, %v247
    %vm267 = vcmp.eq.f32.partialorder %v189, %v251
    %vm268 = vcmp.eq.f32.partialorder %v191, %v255
    %vm269 = vcmp.eq.f32.partialorder %v232, %v259
    %vm270 = vcmp.eq.f32.partialorder %v150, %v243
    %vm271 = vcmp.eq.f32.partialorder %v152, %v247
    %vm272 = vcmp.eq.f32.partialorder %v193, %v251
    %vm273 = vcmp.eq.f32.partialorder %v195, %v255
    %vm274 = vcmp.eq.f32.partialorder %v235, %v259
    %v275 = vsel %vm265, 1, 0
    %v276 = vsel %vm266, 1, 0
    %v277 = vsel %vm267, 1, 0
    %v278 = vsel %vm268, 1, 0
    %v279 = vsel %vm269, 1, 0
    %v280 = vsel %vm270, 1, 0
    %v281 = vsel %vm271, 1, 0
    %v282 = vsel %vm272, 1, 0
    %v283 = vsel %vm273, 1, 0
    %v284 = vsel %vm274, 1, 0
    %v285 = vcvt.s32.f32 %v275
    %v286 = vcvt.s32.f32 %v276
    %v287 = vcvt.s32.f32 %v277
    %v288 = vcvt.s32.f32 %v278
    %v289 = vcvt.s32.f32 %v279
    %v290 = vcvt.s32.f32 %v280
    %v291 = vcvt.s32.f32 %v281
    %v292 = vcvt.s32.f32 %v282
    %v293 = vcvt.s32.f32 %v283
    %v294 = vcvt.s32.f32 %v284
    %v295 = vpack.c.bf16 %v290, %v285
    %v296 = vpack.c.bf16 %v291, %v286
    %v297 = vpack.c.bf16 %v292, %v287
    %v298 = vpack.c.bf16 %v293, %v288
    %v299 = vpack.c.bf16 %v294, %v289
    %v300 = vld [vmem:[#allocation2] sm:$0xf]
    %v301 = vld [vmem:[#allocation2 + $0x4] sm:$0xf]
    %v302 = vld [vmem:[#allocation2 + $0x8] sm:$0xf]
    %v303 = vld [vmem:[#allocation2 + $0xc] sm:$0xf]
    %v304 = vld [vmem:[#allocation2 + $0x10] sm:$0xf]
    %v305 = vld [vmem:[#allocation2 + $0x14] sm:$0xf]
    %v306 = vld [vmem:[#allocation2 + $0x18] sm:$0xf]
    %v307 = vld [vmem:[#allocation2 + $0x1c] sm:$0xf]
    %v308 = vld [vmem:[#allocation2 + $0x20] sm:$0xf]
    %v309 = vld [vmem:[#allocation2 + $0x24] sm:$0xf]
    %v310 = vld [vmem:[#allocation2 + $0x28] sm:$0xf]
    %v311 = vld [vmem:[#allocation2 + $0x2c] sm:$0xf]
    %v312 = vld [vmem:[#allocation2 + $0x30] sm:$0xf]
    %v313 = vld [vmem:[#allocation2 + $0x34] sm:$0xf]
    %v314 = vld [vmem:[#allocation2 + $0x38] sm:$0xf]
    %v315 = vld [vmem:[#allocation2 + $0x3c] sm:$0xf]
    %v316 = vld [vmem:[#allocation2 + $0x40] sm:$0xf]
    %v317 = vld [vmem:[#allocation2 + $0x44] sm:$0xf]
    %v318 = vld [vmem:[#allocation2 + $0x48] sm:$0xf]
    %v319 = vld [vmem:[#allocation2 + $0x4c] sm:$0xf]
    %v320 = vld [vmem:[#allocation2 + $0x50] sm:$0xf]
    %v321 = vld [vmem:[#allocation2 + $0x54] sm:$0xf]
    %v322 = vld [vmem:[#allocation2 + $0x58] sm:$0xf]
    %v323 = vld [vmem:[#allocation2 + $0x5c] sm:$0xf]
    %v324 = vld [vmem:[#allocation2 + $0x60] sm:$0xf]
    %v325 = vld [vmem:[#allocation2 + $0x64] sm:$0xf]
    %v326 = vld [vmem:[#allocation2 + $0x68] sm:$0xf]
    %v327 = vld [vmem:[#allocation2 + $0x6c] sm:$0xf]
    %v328 = vld [vmem:[#allocation2 + $0x70] sm:$0xf]
    %v329 = vld [vmem:[#allocation2 + $0x74] sm:$0xf]
    %v330 = vld [vmem:[#allocation2 + $0x78] sm:$0xf]
    %v331 = vld [vmem:[#allocation2 + $0x7c] sm:$0xf]
    %v332 = vld [vmem:[#allocation2 + $0x80] sm:$0xf]
    %v333 = vld [vmem:[#allocation2 + $0x84] sm:$0xf]
    %v334 = vld [vmem:[#allocation2 + $0x88] sm:$0xf]
    %v335 = vld [vmem:[#allocation2 + $0x8c] sm:$0xf]
    %v336 = vld [vmem:[#allocation2 + $0x90] sm:$0xf]
    %v337 = vld [vmem:[#allocation2 + $0x94] sm:$0xf]
    %v338 = vld [vmem:[#allocation2 + $0x98] sm:$0xf]
    %v339 = vld [vmem:[#allocation2 + $0x9c] sm:$0xf]
    %v340 = vld [vmem:[#allocation2 + $0xa0] sm:$0xf]
    %v341 = vld [vmem:[#allocation2 + $0xa4] sm:$0xf]
    %v342 = vld [vmem:[#allocation2 + $0xa8] sm:$0xf]
    %v343 = vld [vmem:[#allocation2 + $0xac] sm:$0xf]
    %v344 = vld [vmem:[#allocation2 + $0xb0] sm:$0xf]
    %v345 = vld [vmem:[#allocation2 + $0xb4] sm:$0xf]
    %v346 = vld [vmem:[#allocation2 + $0xb8] sm:$0xf]
    %v347 = vld [vmem:[#allocation2 + $0xbc] sm:$0xf]
    %v348 = vld [vmem:[#allocation2 + $0xc0] sm:$0xf]
    %v349 = vld [vmem:[#allocation2 + $0xc4] sm:$0xf]
    %v350 = vld [vmem:[#allocation2 + $0xc8] sm:$0xf]
    %v351 = vld [vmem:[#allocation2 + $0xcc] sm:$0xf]
    %v352 = vld [vmem:[#allocation2 + $0xd0] sm:$0xf]
    %v353 = vld [vmem:[#allocation2 + $0xd4] sm:$0xf]
    %v354 = vld [vmem:[#allocation2 + $0xd8] sm:$0xf]
    %v355 = vld [vmem:[#allocation2 + $0xdc] sm:$0xf]
    %v356 = vld [vmem:[#allocation2 + $0xe0] sm:$0xf]
    %v357 = vld [vmem:[#allocation2 + $0xe4] sm:$0xf]
    %v358 = vld [vmem:[#allocation2 + $0xe8] sm:$0xf]
    %v359 = vld [vmem:[#allocation2 + $0xec] sm:$0xf]
    %v360 = vld [vmem:[#allocation2 + $0xf0] sm:$0xf]
    %v361 = vld [vmem:[#allocation2 + $0xf4] sm:$0xf]
    %v362 = vld [vmem:[#allocation2 + $0xf8] sm:$0xf]
    %v363 = vld [vmem:[#allocation2 + $0xfc] sm:$0xf]
    %v364 = vld [vmem:[#allocation2 + $0x100] sm:$0xf]
    %v365 = vld [vmem:[#allocation2 + $0x104] sm:$0xf]
    %v366 = vld [vmem:[#allocation2 + $0x108] sm:$0xf]
    %v367 = vld [vmem:[#allocation2 + $0x10c] sm:$0xf]
    %v368 = vld [vmem:[#allocation2 + $0x110] sm:$0xf]
    %v369 = vld [vmem:[#allocation2 + $0x114] sm:$0xf]
    %v370 = vld [vmem:[#allocation2 + $0x118] sm:$0xf]
    %v371 = vld [vmem:[#allocation2 + $0x11c] sm:$0xf]
    %v372 = vld [vmem:[#allocation2 + $0x120] sm:$0xf]
    %v373 = vld [vmem:[#allocation2 + $0x124] sm:$0xf]
    %v374 = vld [vmem:[#allocation2 + $0x128] sm:$0xf]
    %v375 = vld [vmem:[#allocation2 + $0x12c] sm:$0xf]
    %v376 = vld [vmem:[#allocation2 + $0x130] sm:$0xf]
    %v377 = vld [vmem:[#allocation2 + $0x134] sm:$0xf]
    %v378 = vld [vmem:[#allocation2 + $0x138] sm:$0xf]
    %v379 = vld [vmem:[#allocation2 + $0x13c] sm:$0xf]
    %v380 = vld [vmem:[%s4] sm:$0x1]
    %v382 = vlaneseq
    %v383 = vshrl.u32 %v382, 7
    %v384 = vsub.s32 0, %v383
    %v385 = vrot.slane %v380, %v384
    %v467 = vunpack.c.l.b16 %v300
    %v468 = vunpack.c.l.b16 %v301
    %v469 = vunpack.c.l.b16 %v302
    %v470 = vunpack.c.l.b16 %v303
    %v471 = vunpack.c.l.b16 %v304
    %v472 = vunpack.c.l.b16 %v305
    %v473 = vunpack.c.l.b16 %v306
    %v474 = vunpack.c.l.b16 %v307
    %v475 = vunpack.c.l.b16 %v308
    %v476 = vunpack.c.l.b16 %v309
    %v477 = vunpack.c.l.b16 %v310
    %v478 = vunpack.c.l.b16 %v311
    %v479 = vunpack.c.l.b16 %v312
    %v480 = vunpack.c.l.b16 %v313
    %v481 = vunpack.c.l.b16 %v314
    %v482 = vunpack.c.l.b16 %v315
    %v483 = vunpack.c.l.b16 %v316
    %v484 = vunpack.c.l.b16 %v317
    %v485 = vunpack.c.l.b16 %v318
    %v486 = vunpack.c.l.b16 %v319
    %v487 = vunpack.c.l.b16 %v320
    %v488 = vunpack.c.l.b16 %v321
    %v489 = vunpack.c.l.b16 %v322
    %v490 = vunpack.c.l.b16 %v323
    %v491 = vunpack.c.l.b16 %v324
    %v492 = vunpack.c.l.b16 %v325
    %v493 = vunpack.c.l.b16 %v326
    %v494 = vunpack.c.l.b16 %v327
    %v495 = vunpack.c.l.b16 %v328
    %v496 = vunpack.c.l.b16 %v329
    %v497 = vunpack.c.l.b16 %v330
    %v498 = vunpack.c.l.b16 %v331
    %v499 = vunpack.c.l.b16 %v332
    %v500 = vunpack.c.l.b16 %v333
    %v501 = vunpack.c.l.b16 %v334
    %v502 = vunpack.c.l.b16 %v335
    %v503 = vunpack.c.l.b16 %v336
    %v504 = vunpack.c.l.b16 %v337
    %v505 = vunpack.c.l.b16 %v338
    %v506 = vunpack.c.l.b16 %v339
    %v507 = vunpack.c.l.b16 %v340
    %v508 = vunpack.c.l.b16 %v341
    %v509 = vunpack.c.l.b16 %v342
    %v510 = vunpack.c.l.b16 %v343
    %v511 = vunpack.c.l.b16 %v344
    %v512 = vunpack.c.l.b16 %v345
    %v513 = vunpack.c.l.b16 %v346
    %v514 = vunpack.c.l.b16 %v347
    %v515 = vunpack.c.l.b16 %v348
    %v516 = vunpack.c.l.b16 %v349
    %v517 = vunpack.c.l.b16 %v350
    %v518 = vunpack.c.l.b16 %v351
    %v519 = vunpack.c.l.b16 %v352
    %v520 = vunpack.c.l.b16 %v353
    %v521 = vunpack.c.l.b16 %v354
    %v522 = vunpack.c.l.b16 %v355
    %v523 = vunpack.c.l.b16 %v356
    %v524 = vunpack.c.l.b16 %v357
    %v525 = vunpack.c.l.b16 %v358
    %v526 = vunpack.c.l.b16 %v359
    %v527 = vunpack.c.l.b16 %v360
    %v528 = vunpack.c.l.b16 %v361
    %v529 = vunpack.c.l.b16 %v362
    %v530 = vunpack.c.l.b16 %v363
    %v531 = vunpack.c.l.b16 %v364
    %v532 = vunpack.c.l.b16 %v365
    %v533 = vunpack.c.l.b16 %v366
    %v534 = vunpack.c.l.b16 %v367
    %v535 = vunpack.c.l.b16 %v368
    %v536 = vunpack.c.l.b16 %v369
    %v537 = vunpack.c.l.b16 %v370
    %v538 = vunpack.c.l.b16 %v371
    %v539 = vunpack.c.l.b16 %v372
    %v540 = vunpack.c.l.b16 %v373
    %v541 = vunpack.c.l.b16 %v374
    %v542 = vunpack.c.l.b16 %v375
    %v543 = vunpack.c.l.b16 %v376
    %v544 = vunpack.c.l.b16 %v377
    %v545 = vunpack.c.l.b16 %v378
    %v546 = vunpack.c.l.b16 %v379
    %v547 = vpack.c.b16 %v468, %v467
    %v548 = vpack.c.b16 %v470, %v469
    %v549 = vpack.c.b16 %v472, %v471
    %v550 = vpack.c.b16 %v474, %v473
    %v551 = vpack.c.b16 %v476, %v475
    %v552 = vpack.c.b16 %v478, %v477
    %v553 = vpack.c.b16 %v480, %v479
    %v554 = vpack.c.b16 %v482, %v481
    %v555 = vpack.c.b16 %v484, %v483
    %v556 = vpack.c.b16 %v486, %v485
    %v557 = vpack.c.b16 %v488, %v487
    %v558 = vpack.c.b16 %v490, %v489
    %v559 = vpack.c.b16 %v492, %v491
    %v560 = vpack.c.b16 %v494, %v493
    %v561 = vpack.c.b16 %v496, %v495
    %v562 = vpack.c.b16 %v498, %v497
    %v563 = vpack.c.b16 %v500, %v499
    %v564 = vpack.c.b16 %v502, %v501
    %v565 = vpack.c.b16 %v504, %v503
    %v566 = vpack.c.b16 %v506, %v505
    %v567 = vpack.c.b16 %v508, %v507
    %v568 = vpack.c.b16 %v510, %v509
    %v569 = vpack.c.b16 %v512, %v511
    %v570 = vpack.c.b16 %v514, %v513
    %v571 = vpack.c.b16 %v516, %v515
    %v572 = vpack.c.b16 %v518, %v517
    %v573 = vpack.c.b16 %v520, %v519
    %v574 = vpack.c.b16 %v522, %v521
    %v575 = vpack.c.b16 %v524, %v523
    %v576 = vpack.c.b16 %v526, %v525
    %v577 = vpack.c.b16 %v528, %v527
    %v578 = vpack.c.b16 %v530, %v529
    %v579 = vpack.c.b16 %v532, %v531
    %v580 = vpack.c.b16 %v534, %v533
    %v581 = vpack.c.b16 %v536, %v535
    %v582 = vpack.c.b16 %v538, %v537
    %v583 = vpack.c.b16 %v540, %v539
    %v584 = vpack.c.b16 %v542, %v541
    %v585 = vpack.c.b16 %v544, %v543
    %v586 = vpack.c.b16 %v546, %v545
    %627 = vmatprep.subr.bf16.mxu0 0
    %628 = vmatpush1.bf16.msra.mxu0 %v547
    %629 = vmatprep.subr.bf16.mxu0 0
    %630 = vmatpush1.bf16.msra.mxu0 %v548
    %631 = vmatprep.subr.bf16.mxu0 0
    %632 = vmatpush1.bf16.msra.mxu0 %v549
    %633 = vmatprep.subr.bf16.mxu0 0
    %634 = vmatpush1.bf16.msra.mxu0 %v550
    %635 = vmatprep.subr.bf16.mxu0 0
    %636 = vmatpush1.bf16.msra.mxu0 %v551
    %637 = vmatprep.subr.bf16.mxu0 0
    %638 = vmatpush1.bf16.msra.mxu0 %v552
    %639 = vmatprep.subr.bf16.mxu0 0
    %640 = vmatpush1.bf16.msra.mxu0 %v553
    %641 = vmatprep.subr.bf16.mxu0 0
    %642 = vmatpush1.bf16.msra.mxu0 %v554
    %643 = vmatprep.subr.bf16.mxu0 0
    %644 = vmatpush1.bf16.msra.mxu0 %v555
    %645 = vmatprep.subr.bf16.mxu0 0
    %646 = vmatpush1.bf16.msra.mxu0 %v556
    %647 = vmatprep.subr.bf16.mxu0 0
    %648 = vmatpush1.bf16.msra.mxu0 %v557
    %649 = vmatprep.subr.bf16.mxu0 0
    %650 = vmatpush1.bf16.msra.mxu0 %v558
    %651 = vmatprep.subr.bf16.mxu0 0
    %652 = vmatpush1.bf16.msra.mxu0 %v559
    %653 = vmatprep.subr.bf16.mxu0 0
    %654 = vmatpush1.bf16.msra.mxu0 %v560
    %655 = vmatprep.subr.bf16.mxu0 0
    %656 = vmatpush1.bf16.msra.mxu0 %v561
    %657 = vmatprep.subr.bf16.mxu0 0
    %658 = vmatpush1.bf16.msra.mxu0 %v562
    %659 = vmatprep.mubr.bf16.mxu0 %v296
    %660 = vmatmul.mubr.bf16.gmra.mrb[0].mxu0 %v295
    %v661 = vpop.f32.mrb[0].mxu0
    %v662 = vadd.f32 %v385, %v661
    %v663 = vpop.f32.mrb[0].mxu0
    %v664 = vpop.f32.mrb[0].mxu0
    %v665 = vadd.f32 %v385, %v664
    %v666 = vpop.f32.mrb[0].mxu0
    %667 = vdwg.mxu0
    %668 = vmatprep.subr.bf16.mxu0 0
    %669 = vmatpush1.bf16.msra.mxu0 %v563
    %670 = vmatprep.subr.bf16.mxu0 0
    %671 = vmatpush1.bf16.msra.mxu0 %v564
    %672 = vmatprep.subr.bf16.mxu0 0
    %673 = vmatpush1.bf16.msra.mxu0 %v565
    %674 = vmatprep.subr.bf16.mxu0 0
    %675 = vmatpush1.bf16.msra.mxu0 %v566
    %676 = vmatprep.subr.bf16.mxu0 0
    %677 = vmatpush1.bf16.msra.mxu0 %v567
    %678 = vmatprep.subr.bf16.mxu0 0
    %679 = vmatpush1.bf16.msra.mxu0 %v568
    %680 = vmatprep.subr.bf16.mxu0 0
    %681 = vmatpush1.bf16.msra.mxu0 %v569
    %682 = vmatprep.subr.bf16.mxu0 0
    %683 = vmatpush1.bf16.msra.mxu0 %v570
    %684 = vmatprep.subr.bf16.mxu0 0
    %685 = vmatpush1.bf16.msra.mxu0 %v571
    %686 = vmatprep.subr.bf16.mxu0 0
    %687 = vmatpush1.bf16.msra.mxu0 %v572
    %688 = vmatprep.subr.bf16.mxu0 0
    %689 = vmatpush1.bf16.msra.mxu0 %v573
    %690 = vmatprep.subr.bf16.mxu0 0
    %691 = vmatpush1.bf16.msra.mxu0 %v574
    %692 = vmatprep.subr.bf16.mxu0 0
    %693 = vmatpush1.bf16.msra.mxu0 %v575
    %694 = vmatprep.subr.bf16.mxu0 0
    %695 = vmatpush1.bf16.msra.mxu0 %v576
    %696 = vmatprep.subr.bf16.mxu0 0
    %697 = vmatpush1.bf16.msra.mxu0 %v577
    %698 = vmatprep.subr.bf16.mxu0 0
    %699 = vmatpush1.bf16.msra.mxu0 %v578
    %700 = vmatprep.mubr.bf16.mxu0 %v298
    %701 = vmatmul.mubr.bf16.gmra.mrb[0].mxu0 %v297
    %v702 = vpop.f32.mrb[0].mxu0
    %v703 = vadd.f32 %v662, %v702
    %v704 = vpop.f32.mrb[0].mxu0
    %v705 = vpop.f32.mrb[0].mxu0
    %v706 = vadd.f32 %v665, %v705
    %v707 = vpop.f32.mrb[0].mxu0
    %708 = vdwg.mxu0
    %709 = vmatprep.subr.bf16.mxu0 0
    %710 = vmatpush1.bf16.msra.mxu0 %v579
    %711 = vmatprep.subr.bf16.mxu0 0
    %712 = vmatpush1.bf16.msra.mxu0 %v580
    %713 = vmatprep.subr.bf16.mxu0 0
    %714 = vmatpush1.bf16.msra.mxu0 %v581
    %715 = vmatprep.subr.bf16.mxu0 0
    %716 = vmatpush1.bf16.msra.mxu0 %v582
    %717 = vmatprep.subr.bf16.mxu0 0
    %718 = vmatpush1.bf16.msra.mxu0 %v583
    %719 = vmatprep.subr.bf16.mxu0 0
    %720 = vmatpush1.bf16.msra.mxu0 %v584
    %721 = vmatprep.subr.bf16.mxu0 0
    %722 = vmatpush1.bf16.msra.mxu0 %v585
    %723 = vmatprep.subr.bf16.mxu0 0
    %724 = vmatpush1.bf16.msra.mxu0 %v586
    %725 = vmatprep.subr.bf16.mxu0 0
    %726 = vmatpush1.bf16.msra.mxu0 0
    %727 = vmatprep.subr.bf16.mxu0 0
    %728 = vmatpush1.bf16.msra.mxu0 0
    %729 = vmatprep.subr.bf16.mxu0 0
    %730 = vmatpush1.bf16.msra.mxu0 0
    %731 = vmatprep.subr.bf16.mxu0 0
    %732 = vmatpush1.bf16.msra.mxu0 0
    %733 = vmatprep.subr.bf16.mxu0 0
    %734 = vmatpush1.bf16.msra.mxu0 0
    %735 = vmatprep.subr.bf16.mxu0 0
    %736 = vmatpush1.bf16.msra.mxu0 0
    %737 = vmatprep.subr.bf16.mxu0 0
    %738 = vmatpush1.bf16.msra.mxu0 0
    %739 = vmatprep.subr.bf16.mxu0 0
    %740 = vmatpush1.bf16.msra.mxu0 0
    %741 = vmatprep.mubr.bf16.mxu0 0
    %742 = vmatmul.mubr.bf16.gmra.mrb[0].mxu0 %v299
    %v743 = vpop.f32.mrb[0].mxu0
    %v744 = vadd.f32 %v703, %v743
    %v745 = vpop.f32.mrb[0].mxu0
    %v746 = vpop.f32.mrb[0].mxu0
    %v747 = vadd.f32 %v706, %v746
    %v748 = vpop.f32.mrb[0].mxu0
    %749 = vdwg.mxu0
    %v750 = vmax.f32 %v744, 0.0
    %v751 = vmax.f32 %v747, 0.0
    %v752 = vpack.c.bf16 %v751, %v750
    %v753 = vld [vmem:[%s5] sm:$0xf]
    %v754 = vld [vmem:[%s5 + $0x4] sm:$0xf]
    %v755 = vld [vmem:[%s5 + $0x8] sm:$0xf]
    %v756 = vld [vmem:[%s5 + $0xc] sm:$0xf]
    %v757 = vld [vmem:[%s5 + $0x10] sm:$0xf]
    %v758 = vld [vmem:[%s5 + $0x14] sm:$0xf]
    %v759 = vld [vmem:[%s5 + $0x18] sm:$0xf]
    %v760 = vld [vmem:[%s5 + $0x1c] sm:$0xf]
    %v761 = vld [vmem:[%s5 + $0x20] sm:$0xf]
    %v762 = vld [vmem:[%s5 + $0x24] sm:$0xf]
    %v763 = vld [vmem:[%s5 + $0x28] sm:$0xf]
    %v764 = vld [vmem:[%s5 + $0x2c] sm:$0xf]
    %v765 = vld [vmem:[%s5 + $0x30] sm:$0xf]
    %v766 = vld [vmem:[%s5 + $0x34] sm:$0xf]
    %v767 = vld [vmem:[%s5 + $0x38] sm:$0xf]
    %v768 = vld [vmem:[%s5 + $0x3c] sm:$0xf]
    %v785 = vunpack.c.l.b16 %v753
    %v786 = vunpack.c.l.b16 %v754
    %v787 = vunpack.c.l.b16 %v755
    %v788 = vunpack.c.l.b16 %v756
    %v789 = vunpack.c.l.b16 %v757
    %v790 = vunpack.c.l.b16 %v758
    %v791 = vunpack.c.l.b16 %v759
    %v792 = vunpack.c.l.b16 %v760
    %v793 = vunpack.c.l.b16 %v761
    %v794 = vunpack.c.l.b16 %v762
    %v795 = vunpack.c.l.b16 %v763
    %v796 = vunpack.c.l.b16 %v764
    %v797 = vunpack.c.l.b16 %v765
    %v798 = vunpack.c.l.b16 %v766
    %v799 = vunpack.c.l.b16 %v767
    %v800 = vunpack.c.l.b16 %v768
    %v801 = vpack.c.b16 %v786, %v785
    %v802 = vpack.c.b16 %v788, %v787
    %v803 = vpack.c.b16 %v790, %v789
    %v804 = vpack.c.b16 %v792, %v791
    %v805 = vpack.c.b16 %v794, %v793
    %v806 = vpack.c.b16 %v796, %v795
    %v807 = vpack.c.b16 %v798, %v797
    %v808 = vpack.c.b16 %v800, %v799
    %817 = vmatprep.subr.bf16.mxu0 0
    %818 = vmatpush1.bf16.msra.mxu0 %v801
    %819 = vmatprep.subr.bf16.mxu0 0
    %820 = vmatpush1.bf16.msra.mxu0 %v802
    %821 = vmatprep.subr.bf16.mxu0 0
    %822 = vmatpush1.bf16.msra.mxu0 %v803
    %823 = vmatprep.subr.bf16.mxu0 0
    %824 = vmatpush1.bf16.msra.mxu0 %v804
    %825 = vmatprep.subr.bf16.mxu0 0
    %826 = vmatpush1.bf16.msra.mxu0 %v805
    %827 = vmatprep.subr.bf16.mxu0 0
    %828 = vmatpush1.bf16.msra.mxu0 %v806
    %829 = vmatprep.subr.bf16.mxu0 0
    %830 = vmatpush1.bf16.msra.mxu0 %v807
    %831 = vmatprep.subr.bf16.mxu0 0
    %832 = vmatpush1.bf16.msra.mxu0 %v808
    %833 = vmatprep.subr.bf16.mxu0 0
    %834 = vmatpush1.bf16.msra.mxu0 0
    %835 = vmatprep.subr.bf16.mxu0 0
    %836 = vmatpush1.bf16.msra.mxu0 0
    %837 = vmatprep.subr.bf16.mxu0 0
    %838 = vmatpush1.bf16.msra.mxu0 0
    %839 = vmatprep.subr.bf16.mxu0 0
    %840 = vmatpush1.bf16.msra.mxu0 0
    %841 = vmatprep.subr.bf16.mxu0 0
    %842 = vmatpush1.bf16.msra.mxu0 0
    %843 = vmatprep.subr.bf16.mxu0 0
    %844 = vmatpush1.bf16.msra.mxu0 0
    %845 = vmatprep.subr.bf16.mxu0 0
    %846 = vmatpush1.bf16.msra.mxu0 0
    %847 = vmatprep.subr.bf16.mxu0 0
    %848 = vmatpush1.bf16.msra.mxu0 0
    %849 = vmatprep.mubr.bf16.mxu0 0
    %850 = vmatmul.mubr.bf16.gmra.mrb[0].mxu0 %v752
    %v851 = vpop.f32.mrb[0].mxu0
    %v852 = vadd.f32 0.0, %v851
    %v853 = vpop.f32.mrb[0].mxu0
    %v854 = vpop.f32.mrb[0].mxu0
    %v855 = vadd.f32 0.0, %v854
    %v856 = vpop.f32.mrb[0].mxu0
    %857 = vdwg.mxu0
    %vm858 = vcmask 523264
    %859 = vst.msk [vmem:[%s6] sm:$0xff] %vm858, %v852
    %860 = vst.msk [vmem:[%s6 + $0x8] sm:$0xff] %vm858, %v855
    // Predicated region
    $region30: #{forward.1} parent=1 // pred_check
      _
    $region31: #{forward.1} parent=1 // pred_check_branch
      %862 = sbr.rel (0) target = $region33
    $region32: #{forward.1} parent=1 // pred_region
      _
    $region33: #{forward.1} parent=1 // pred_fallthru
      _
    // Predicated region
    $region34: #{forward.1} parent=1 // pred_check
      _
    $region35: #{forward.1} parent=1 // pred_check_branch
      %864 = sbr.rel (0) target = $region37
    $region36: #{forward.1} parent=1 // pred_region
      _
    $region37: #{forward.1} parent=1 // pred_fallthru
      _
    %865 = vsyncpa [#allocation3], 1

</llo_original>
